<compile_context>
chip_gen: v7x
topology: tpu7x:2x2x1
jax: 0.10.0
libtpu: 0.0.40
codegen_flags: <defaults>
</compile_context>

<pallas_src>
import functools

import jax
import jax.numpy as jnp
from jax.experimental import pallas as pl
from jax.experimental.pallas import tpu as pltpu

LANE = 128      # vreg lane width
SUBLANE = 8     # vreg sublane count


def _round_up(x, m):
    return ((x + m - 1) // m) * m


def dqn_kernel(x_ref, w1_ref, b1_ref, w2_ref, b2_ref, q_ref, a_ref, *, num_actions):
    # ---- Layer 1: (TB, S) @ (S, H) on the MXU, f32 accumulation. -------------
    h = jnp.dot(x_ref[...], w1_ref[...], preferred_element_type=jnp.float32)
    h = jnp.maximum(h + b1_ref[...], 0.0)            # bias + ReLU in f32 (VPU)

    # ---- Layer 2: lane-dense output (A padded to A_pad = multiple of 128). ---
    q = jnp.dot(h.astype(w2_ref.dtype), w2_ref[...],
                preferred_element_type=jnp.float32)
    q = q + b2_ref[...]                              # padded b2 lanes are zero
    q_ref[...] = q.astype(q_ref.dtype)               # full-lane (unmasked) store

    # ---- Fused greedy action: argmax over the real (unpadded) actions. -------
    col = jax.lax.broadcasted_iota(jnp.int32, q.shape, 1)
    q_valid = jnp.where(col < num_actions, q, -jnp.inf)
    q_max = jnp.max(q_valid, axis=-1, keepdims=True)
    # First index attaining the max (matches jnp.argmax tie-breaking); do the
    # lane reduction in f32 (indices <= 128 are exact) and cast to int32.
    idx_f = jnp.min(
        jnp.where(q_valid == q_max, col.astype(jnp.float32), float(q.shape[-1])),
        axis=-1, keepdims=True)
    a_ref[...] = idx_f.astype(jnp.int32)


def dqn_forward(x, w1, b1, w2, b2, *, block_b=256, compute_dtype=jnp.bfloat16):
    """Fused DQN forward.

    x:  (B, state_dim)
    w1: (state_dim, 64), b1: (64,)
    w2: (64, action_dim), b2: (action_dim,)
    Returns (q_values (B, action_dim) f32, greedy_actions (B,) int32).
    """
    B, S = x.shape
    H = w1.shape[1]
    A = w2.shape[1]
    A_pad = _round_up(A, LANE)                       # lane-dense output width

    # --- cast / pad parameters (zeros in padded lanes so Q_pad == 0 there) ---
    x_c = x.astype(compute_dtype)
    w1_c = w1.astype(compute_dtype)
    b1_p = b1.reshape(1, H).astype(jnp.float32)
    w2_p = jnp.zeros((H, A_pad), compute_dtype).at[:, :A].set(w2.astype(compute_dtype))
    b2_p = jnp.zeros((1, A_pad), jnp.float32).at[0, :A].set(b2.astype(jnp.float32))

    # --- batch tiling: TB rows per grid step, batch padded to a multiple ------
    if B <= block_b:
        TB = max(SUBLANE, _round_up(B, SUBLANE))     # single tile
    else:
        TB = block_b                                 # multiple of 8 by choice
    B_pad = _round_up(B, TB)
    if B_pad != B:
        x_c = jnp.pad(x_c, ((0, B_pad - B), (0, 0)))
    grid = (B_pad // TB,)

    # VMEM footprint per step: x (TB,S) + q (TB,A_pad) f32 + params, double
    # buffered -> well under the 32 MiB default scoped limit even on v7x.
    q_pad, actions = pl.pallas_call(
        functools.partial(dqn_kernel, num_actions=A),
        out_shape=(
            jax.ShapeDtypeStruct((B_pad, A_pad), jnp.float32),
            jax.ShapeDtypeStruct((B_pad, 1), jnp.int32),
        ),
        grid_spec=pltpu.PrefetchScalarGridSpec(
            num_scalar_prefetch=0,
            grid=grid,
            in_specs=[
                pl.BlockSpec((TB, S), lambda i: (i, 0)),        # streamed x tile
                pl.BlockSpec((S, H), lambda i: (0, 0)),         # resident weights
                pl.BlockSpec((1, H), lambda i: (0, 0)),
                pl.BlockSpec((H, A_pad), lambda i: (0, 0)),
                pl.BlockSpec((1, A_pad), lambda i: (0, 0)),
            ],
            out_specs=[
                pl.BlockSpec((TB, A_pad), lambda i: (i, 0)),    # lane-dense Q
                pl.BlockSpec((TB, 1), lambda i: (i, 0)),        # greedy action
            ],
        ),
        compiler_params=pltpu.CompilerParams(
            dimension_semantics=("parallel",),                  # v7x: 2 TCs
        ),
    )(x_c, w1_c, b1_p, w2_p, b2_p)

    return q_pad[:B, :A], actions[:B, 0]


def init_dqn_params(key, state_dim, action_dim, hidden=64, dtype=jnp.float32):
    """PyTorch nn.Linear default init: U(-1/sqrt(fan_in), 1/sqrt(fan_in))."""
    k1, k2, k3, k4 = jax.random.split(key, 4)
    bound1 = 1.0 / jnp.sqrt(state_dim)
    bound2 = 1.0 / jnp.sqrt(hidden)
    # Stored as (in, out) for direct x @ W in the kernel.
    w1 = jax.random.uniform(k1, (state_dim, hidden), dtype, -bound1, bound1)
    b1 = jax.random.uniform(k2, (hidden,), dtype, -bound1, bound1)
    w2 = jax.random.uniform(k3, (hidden, action_dim), dtype, -bound2, bound2)
    b2 = jax.random.uniform(k4, (action_dim,), dtype, -bound2, bound2)
    return w1, b1, w2, b2


def dqn_reference(x, w1, b1, w2, b2, compute_dtype=jnp.float32):
    xc = x.astype(compute_dtype)
    h = jnp.dot(xc, w1.astype(compute_dtype), preferred_element_type=jnp.float32)
    h = jnp.maximum(h + b1.astype(jnp.float32), 0.0)
    q = jnp.dot(h.astype(compute_dtype), w2.astype(compute_dtype),
                preferred_element_type=jnp.float32)
    return q + b2.astype(jnp.float32)


if __name__ == "__main__":
    key = jax.random.PRNGKey(0)
    kx, kp = jax.random.split(key)

    B, state_dim, action_dim = 8, 16, 4
    x = jax.random.normal(kx, (B, state_dim), jnp.float32)
    w1, b1, w2, b2 = init_dqn_params(kp, state_dim, action_dim)

    # 1) f32 compute path: tight check against the exact reference.
    q32, a32 = dqn_forward(x, w1, b1, w2, b2, compute_dtype=jnp.float32)
    q32 = jax.block_until_ready(q32)
    ref32 = dqn_reference(x, w1, b1, w2, b2, jnp.float32)
    assert q32.shape == (B, action_dim)
    assert jnp.allclose(q32, ref32, atol=1e-5, rtol=1e-5), "f32 mismatch vs reference"
    assert jnp.array_equal(a32, jnp.argmax(q32, axis=-1)), "fused argmax mismatch"

    # 2) default bf16 compute path (perf config for v6e/v7x), loose tolerance.
    qbf, abf = dqn_forward(x, w1, b1, w2, b2)
    qbf = jax.block_until_ready(qbf)
    refbf = dqn_reference(x, w1, b1, w2, b2, jnp.bfloat16)
    assert jnp.allclose(qbf, refbf, atol=5e-2, rtol=5e-2), "bf16 mismatch vs reference"
    assert jnp.array_equal(abf, jnp.argmax(qbf, axis=-1)), "fused argmax mismatch (bf16)"

    # 3) multi-tile grid: exercises batch tiling, padding, and the parallel axis.
    B2 = 200
    x2 = jax.random.normal(kx, (B2, state_dim), jnp.float32)
    q2, a2 = dqn_forward(x2, w1, b1, w2, b2, compute_dtype=jnp.float32, block_b=64)
    q2 = jax.block_until_ready(q2)
    ref2 = dqn_reference(x2, w1, b1, w2, b2, jnp.float32)
    assert q2.shape == (B2, action_dim)
    assert jnp.allclose(q2, ref2, atol=1e-5, rtol=1e-5), "tiled mismatch vs reference"
    assert jnp.array_equal(a2, jnp.argmax(q2, axis=-1)), "tiled fused argmax mismatch"

    print("KERNEL_OK")
</pallas_src>

<mosaic_0001>
module attributes {stable_mosaic.version = 11 : i64} {
  func.func @dqn_kernel(%arg0: i32, %arg1: memref<8x16xf32, #tpu.memory_space<vmem>>, %arg2: memref<16x64xf32, #tpu.memory_space<vmem>>, %arg3: memref<1x64xf32, #tpu.memory_space<vmem>>, %arg4: memref<64x128xf32, #tpu.memory_space<vmem>>, %arg5: memref<1x128xf32, #tpu.memory_space<vmem>>, %arg6: memref<8x128xf32, #tpu.memory_space<vmem>>, %arg7: memref<8x1xi32, #tpu.memory_space<vmem>>) attributes {dimension_semantics = [#tpu.dimension_semantics<parallel>], iteration_bounds = array<i64: 1>, scalar_prefetch = 0 : i64, scratch_operands = 0 : i64, tpu.core_type = #tpu.core_type<tc>, window_params = [{transform_indices = @transform_0, window_bounds = array<i64: 8, 16>}, {pipeline_mode = #tpu.pipeline_mode<synchronous>, transform_indices = @transform_1, window_bounds = array<i64: 16, 64>}, {pipeline_mode = #tpu.pipeline_mode<synchronous>, transform_indices = @transform_2, window_bounds = array<i64: 1, 64>}, {pipeline_mode = #tpu.pipeline_mode<synchronous>, transform_indices = @transform_3, window_bounds = array<i64: 64, 128>}, {pipeline_mode = #tpu.pipeline_mode<synchronous>, transform_indices = @transform_4, window_bounds = array<i64: 1, 128>}, {transform_indices = @transform_5, window_bounds = array<i64: 8, 128>}, {transform_indices = @transform_6, window_bounds = array<i64: 8, 1>}]} {
    %c0 = arith.constant 0 : index
    %c0_0 = arith.constant 0 : index
    %0 = vector.load %arg1[%c0, %c0_0] : memref<8x16xf32, #tpu.memory_space<vmem>>, vector<8x16xf32>
    %c0_1 = arith.constant 0 : index
    %c0_2 = arith.constant 0 : index
    %1 = vector.load %arg2[%c0_1, %c0_2] : memref<16x64xf32, #tpu.memory_space<vmem>>, vector<16x64xf32>
    %cst = arith.constant dense<0.000000e+00> : vector<8x64xf32>
    %2 = tpu.matmul %0, %1, %cst {dimension_numbers = #tpu.dot_dimension_numbers<[1], [0], [0], [1], [0, 0, 1, 1], [], []>} : vector<8x16xf32>, vector<16x64xf32>, vector<8x64xf32> -> vector<8x64xf32>
    %c0_3 = arith.constant 0 : index
    %c0_4 = arith.constant 0 : index
    %3 = vector.load %arg3[%c0_3, %c0_4] : memref<1x64xf32, #tpu.memory_space<vmem>>, vector<1x64xf32>
    %4 = vector.broadcast %3 : vector<1x64xf32> to vector<8x64xf32>
    %5 = arith.addf %2, %4 : vector<8x64xf32>
    %cst_5 = arith.constant 0.000000e+00 : f32
    %6 = vector.broadcast %cst_5 : f32 to vector<8x64xf32>
    %7 = arith.maximumf %5, %6 : vector<8x64xf32>
    %c0_6 = arith.constant 0 : index
    %c0_7 = arith.constant 0 : index
    %8 = vector.load %arg4[%c0_6, %c0_7] : memref<64x128xf32, #tpu.memory_space<vmem>>, vector<64x128xf32>
    %cst_8 = arith.constant dense<0.000000e+00> : vector<8x128xf32>
    %9 = tpu.matmul %7, %8, %cst_8 {dimension_numbers = #tpu.dot_dimension_numbers<[1], [0], [0], [1], [0, 0, 1, 1], [], []>} : vector<8x64xf32>, vector<64x128xf32>, vector<8x128xf32> -> vector<8x128xf32>
    %c0_9 = arith.constant 0 : index
    %c0_10 = arith.constant 0 : index
    %10 = vector.load %arg5[%c0_9, %c0_10] : memref<1x128xf32, #tpu.memory_space<vmem>>, vector<1x128xf32>
    %11 = vector.broadcast %10 : vector<1x128xf32> to vector<8x128xf32>
    %12 = arith.addf %9, %11 : vector<8x128xf32>
    %c0_11 = arith.constant 0 : index
    %c0_12 = arith.constant 0 : index
    %13 = vector.load %arg6[%c0_11, %c0_12] : memref<8x128xf32, #tpu.memory_space<vmem>>, vector<8x128xf32>
    tpu.vector_store %arg6[%c0_11, %c0_12], %12 {strides = array<i32>} : memref<8x128xf32, #tpu.memory_space<vmem>>, vector<8x128xf32>,
    %14 = tpu.iota {dimensions = array<i32: 1>} : vector<8x128xi32>
    %c4_i32 = arith.constant 4 : i32
    %15 = vector.broadcast %c4_i32 : i32 to vector<8x128xi32>
    %16 = arith.cmpi slt, %14, %15 : vector<8x128xi32>
    %cst_13 = arith.constant 0xFF800000 : f32
    %17 = vector.broadcast %cst_13 : f32 to vector<8x128xf32>
    %18 = arith.select %16, %12, %17 : vector<8x128xi1>, vector<8x128xf32>
    %cst_14 = arith.constant dense<0xFF800000> : vector<8xf32>
    %19 = vector.multi_reduction <maximumf>, %18, %cst_14 [1] : vector<8x128xf32> to vector<8xf32>
    %20 = vector.shape_cast %19 : vector<8xf32> to vector<8x1xf32>
    %21 = vector.broadcast %20 : vector<8x1xf32> to vector<8x128xf32>
    %22 = arith.cmpf oeq, %18, %21 : vector<8x128xf32>
    %23 = arith.sitofp %14 : vector<8x128xi32> to vector<8x128xf32>
    %cst_15 = arith.constant 1.280000e+02 : f32
    %24 = vector.broadcast %cst_15 : f32 to vector<8x128xf32>
    %25 = arith.select %22, %23, %24 : vector<8x128xi1>, vector<8x128xf32>
    %cst_16 = arith.constant dense<0x7F800000> : vector<8xf32>
    %26 = vector.multi_reduction <minimumf>, %25, %cst_16 [1] : vector<8x128xf32> to vector<8xf32>
    %27 = vector.shape_cast %26 : vector<8xf32> to vector<8x1xf32>
    %28 = arith.fptosi %27 : vector<8x1xf32> to vector<8x1xi32>
    %c0_17 = arith.constant 0 : index
    %c0_18 = arith.constant 0 : index
    %29 = vector.load %arg7[%c0_17, %c0_18] : memref<8x1xi32, #tpu.memory_space<vmem>>, vector<8x1xi32>
    tpu.vector_store %arg7[%c0_17, %c0_18], %28 {strides = array<i32>} : memref<8x1xi32, #tpu.memory_space<vmem>>, vector<8x1xi32>,
    return
  }
  func.func @transform_0(%arg0: i32) -> (i32, i32) {
    %c0_i32 = arith.constant 0 : i32
    %c0_i32_0 = arith.constant 0 : i32
    return %arg0, %c0_i32 : i32, i32
  }
  func.func @transform_1(%arg0: i32) -> (i32, i32) {
    %c0_i32 = arith.constant 0 : i32
    %c0_i32_0 = arith.constant 0 : i32
    %c0_i32_1 = arith.constant 0 : i32
    return %c0_i32, %c0_i32_0 : i32, i32
  }
  func.func @transform_2(%arg0: i32) -> (i32, i32) {
    %c0_i32 = arith.constant 0 : i32
    %c0_i32_0 = arith.constant 0 : i32
    %c0_i32_1 = arith.constant 0 : i32
    return %c0_i32, %c0_i32_0 : i32, i32
  }
  func.func @transform_3(%arg0: i32) -> (i32, i32) {
    %c0_i32 = arith.constant 0 : i32
    %c0_i32_0 = arith.constant 0 : i32
    %c0_i32_1 = arith.constant 0 : i32
    return %c0_i32, %c0_i32_0 : i32, i32
  }
  func.func @transform_4(%arg0: i32) -> (i32, i32) {
    %c0_i32 = arith.constant 0 : i32
    %c0_i32_0 = arith.constant 0 : i32
    %c0_i32_1 = arith.constant 0 : i32
    return %c0_i32, %c0_i32_0 : i32, i32
  }
  func.func @transform_5(%arg0: i32) -> (i32, i32) {
    %c0_i32 = arith.constant 0 : i32
    %c0_i32_0 = arith.constant 0 : i32
    return %arg0, %c0_i32 : i32, i32
  }
  func.func @transform_6(%arg0: i32) -> (i32, i32) {
    %c0_i32 = arith.constant 0 : i32
    %c0_i32_0 = arith.constant 0 : i32
    return %arg0, %c0_i32 : i32, i32
  }
}

</mosaic_0001>

<llo_original>
// kernel: tpu_custom_call.1
$region0: #{tpu_custom_call.1}
  #allocation0 [shape = 'u32[]', space=smem, size = 0x4, offset = 0x4, fixed_abs, tag = 'smem constant byte address 0x4 - core index']
  #allocation1 [shape = 'u32[144,128]{1,0:T(1,128)}', space=vmem, size = 0x12000, scoped, tag = 'internal scratch']
  %s0 = inlined_call_operand.hbm [shape: f32[8,16], index: 0, kind: input, shape index: {}]
  %s1 = inlined_call_operand.hbm [shape: f32[16,64], index: 1, kind: input, shape index: {}]
  %s2 = inlined_call_operand.vmem [shape: f32[1,64], index: 2, kind: input, shape index: {}]
  %s3 = inlined_call_operand.hbm [shape: f32[64,128], index: 3, kind: input, shape index: {}]
  %s4 = inlined_call_operand.vmem [shape: f32[1,128], index: 4, kind: input, shape index: {}]
  %s5 = inlined_call_operand.hbm [shape: f32[8,128], index: 5, kind: output, shape index: {0}]
  %s6 = inlined_call_operand.vmem [shape: s32[8,1], index: 6, kind: output, shape index: {1}]
  %7 = xla_tuple %s5, %s6
  %s8 = sld [smem:[#allocation0]]
  $region50: #{tpu_custom_call.1} parent=0
    _
  %s10 = ssub.s32 1, %s8
  %s11 = scalar_select 0, %s10, %s8
  $region1: #{tpu_custom_call.1} parent=0
    #allocation2 [shape = 'u8[4096]{0}', space=vmem, size = 0x1000, scoped, tag = 'input window, operand 0, single buffered']
    #allocation3 [shape = 's32[1]{0}', space=sflag, size = 0x4, scoped, tag = 'scoped memory for tpu_custom_call.1']
    #allocation4 [shape = 's32[1]{0}', space=sflag, size = 0x4, scoped, tag = 'scoped memory for tpu_custom_call.1']
    #allocation5 [shape = 'u8[8192]{0}', space=vmem, size = 0x2000, scoped, tag = 'input window, operand 1, single buffered']
    #allocation6 [shape = 's32[1]{0}', space=sflag, size = 0x4, scoped, tag = 'scoped memory for tpu_custom_call.1']
    #allocation7 [shape = 'u8[32768]{0}', space=vmem, size = 0x8000, scoped, tag = 'input window, operand 3, single buffered']
    #allocation8 [shape = 'u8[4096]{0}', space=vmem, size = 0x1000, scoped, tag = 'output window, operand 0, single buffered']
    %12 = vsyncpa [#allocation3], 0
    %13 = vsyncpa [#allocation6], 0
    %14 = vsyncpa [#allocation4], 0
    // Predicated region
    $region2: #{tpu_custom_call.1} parent=1 // pred_check
      _
    $region3: #{tpu_custom_call.1} parent=1 // pred_check_branch
      %16 = sbr.rel (0) target = $region5
    $region4: #{tpu_custom_call.1} parent=1 // pred_region
      %s18 = ssub.s32 128, 128
      %19 = vsyncadd [#allocation3], %s18
      %s21 = sshll.u32 [#allocation2], 4
      %s22 = int_to_ptr.vmem [resolvable:$true] %s21
      %24 = dma.hbm_to_vmem [thread:$0]  %s0, 128, %s22, [#allocation3]
    $region5: #{tpu_custom_call.1} parent=1 // pred_fallthru
      _
    // Predicated region
    $region6: #{tpu_custom_call.1} parent=1 // pred_check
      _
    $region7: #{tpu_custom_call.1} parent=1 // pred_check_branch
      %26 = sbr.rel (0) target = $region9
    $region8: #{tpu_custom_call.1} parent=1 // pred_region
      %s28 = ssub.s32 256, 256
      %29 = vsyncadd [#allocation6], %s28
      %s30 = sshll.u32 [#allocation5], 4
      %s31 = int_to_ptr.vmem [resolvable:$true] %s30
      %36 = dma.hbm_to_vmem [thread:$0]  %s1, 256, %s31, [#allocation6], 128, 128, 8
    $region9: #{tpu_custom_call.1} parent=1 // pred_fallthru
      _
    // Predicated region
    $region10: #{tpu_custom_call.1} parent=1 // pred_check
      _
    $region11: #{tpu_custom_call.1} parent=1 // pred_check_branch
      %38 = sbr.rel (0) target = $region13
    $region12: #{tpu_custom_call.1} parent=1 // pred_region
      _
    $region13: #{tpu_custom_call.1} parent=1 // pred_fallthru
      _
    // Predicated region
    $region14: #{tpu_custom_call.1} parent=1 // pred_check
      _
    $region15: #{tpu_custom_call.1} parent=1 // pred_check_branch
      %40 = sbr.rel (0) target = $region17
    $region16: #{tpu_custom_call.1} parent=1 // pred_region
      %s42 = ssub.s32 1024, 1024
      %43 = vsyncadd [#allocation6], %s42
      %s44 = sshll.u32 [#allocation7], 4
      %s45 = int_to_ptr.vmem [resolvable:$true] %s44
      %50 = dma.hbm_to_vmem [thread:$0]  %s3, 1024, %s45, [#allocation6], 128, 128, 8
    $region17: #{tpu_custom_call.1} parent=1 // pred_fallthru
      _
    // Predicated region
    $region18: #{tpu_custom_call.1} parent=1 // pred_check
      _
    $region19: #{tpu_custom_call.1} parent=1 // pred_check_branch
      %52 = sbr.rel (0) target = $region21
    $region20: #{tpu_custom_call.1} parent=1 // pred_region
      _
    $region21: #{tpu_custom_call.1} parent=1 // pred_fallthru
      _
    // Predicated region
    $region22: #{tpu_custom_call.1} parent=1 // pred_check
      _
    $region23: #{tpu_custom_call.1} parent=1 // pred_check_branch
      %54 = sbr.rel (0) target = $region25
    $region24: #{tpu_custom_call.1} parent=1 // pred_region
      %55 = dma.done [#allocation3], 128
    $region25: #{tpu_custom_call.1} parent=1 // pred_fallthru
      _
    // Predicated region
    $region26: #{tpu_custom_call.1} parent=1 // pred_check
      _
    $region27: #{tpu_custom_call.1} parent=1 // pred_check_branch
      %57 = sbr.rel (0) target = $region29
    $region28: #{tpu_custom_call.1} parent=1 // pred_region
      %58 = dma.done [#allocation6], 256
    $region29: #{tpu_custom_call.1} parent=1 // pred_fallthru
      _
    // Predicated region
    $region30: #{tpu_custom_call.1} parent=1 // pred_check
      _
    $region31: #{tpu_custom_call.1} parent=1 // pred_check_branch
      %60 = sbr.rel (0) target = $region33
    $region32: #{tpu_custom_call.1} parent=1 // pred_region
      %61 = dma.done [#allocation6], 1024
    $region33: #{tpu_custom_call.1} parent=1 // pred_fallthru
      _
    %v62 = vld [vmem:[#allocation2] sm:$0xff]
    %v63 = vld [vmem:[#allocation5] sm:$0xff]
    %v64 = vld [vmem:[#allocation5 + $0x8] sm:$0xff]
    %v65 = vld [vmem:[%s2] sm:$0x1]
    %v67 = vlaneseq
    %v68 = vshrl.u32 %v67, 7
    %v69 = vsub.s32 0, %v68
    %v70 = vrot.slane %v65, %v69
    %vm72 = vcmask 130048
    %v74 = vsel %vm72, %v62, 0
    %76 = vmatprep.subr.mxu0 0.0
    %77 = vmatpush1.msra.mxu0 %v63
    %78 = vmatprep.subr.mxu0 0.0
    %79 = vmatpush1.msra.mxu0 %v64
    %80 = vmatprep.subr.mxu0 0.0
    %81 = vmatpush1.msra.mxu0 0.0
    %82 = vmatprep.subr.mxu0 0.0
    %83 = vmatpush1.msra.mxu0 0.0
    %84 = vmatprep.subr.mxu0 0.0
    %85 = vmatpush1.msra.mxu0 0.0
    %86 = vmatprep.subr.mxu0 0.0
    %87 = vmatpush1.msra.mxu0 0.0
    %88 = vmatprep.subr.mxu0 0.0
    %89 = vmatpush1.msra.mxu0 0.0
    %90 = vmatprep.subr.mxu0 0.0
    %91 = vmatpush1.msra.mxu0 0.0
    %92 = vmatprep.subr.mxu0 0.0
    %93 = vmatpush1.msra.mxu0 0.0
    %94 = vmatprep.subr.mxu0 0.0
    %95 = vmatpush1.msra.mxu0 0.0
    %96 = vmatprep.subr.mxu0 0.0
    %97 = vmatpush1.msra.mxu0 0.0
    %98 = vmatprep.subr.mxu0 0.0
    %99 = vmatpush1.msra.mxu0 0.0
    %100 = vmatprep.subr.mxu0 0.0
    %101 = vmatpush1.msra.mxu0 0.0
    %102 = vmatprep.subr.mxu0 0.0
    %103 = vmatpush1.msra.mxu0 0.0
    %104 = vmatprep.subr.mxu0 0.0
    %105 = vmatpush1.msra.mxu0 0.0
    %106 = vmatprep.subr.mxu0 0.0
    %107 = vmatpush1.msra.mxu0 0.0
    %108 = vmatprep.subr.mxu0 0.0
    %109 = vmatpush1.msra.mxu0 0.0
    %110 = vmatprep.subr.mxu0 0.0
    %111 = vmatpush1.msra.mxu0 0.0
    %112 = vmatprep.subr.mxu0 0.0
    %113 = vmatpush1.msra.mxu0 0.0
    %114 = vmatprep.subr.mxu0 0.0
    %115 = vmatpush1.msra.mxu0 0.0
    %116 = vmatprep.subr.mxu0 0.0
    %117 = vmatpush1.msra.mxu0 0.0
    %118 = vmatprep.subr.mxu0 0.0
    %119 = vmatpush1.msra.mxu0 0.0
    %120 = vmatprep.subr.mxu0 0.0
    %121 = vmatpush1.msra.mxu0 0.0
    %122 = vmatprep.subr.mxu0 0.0
    %123 = vmatpush1.msra.mxu0 0.0
    %124 = vmatprep.subr.mxu0 0.0
    %125 = vmatpush1.msra.mxu0 0.0
    %126 = vmatprep.subr.mxu0 0.0
    %127 = vmatpush1.msra.mxu0 0.0
    %128 = vmatprep.subr.mxu0 0.0
    %129 = vmatpush1.msra.mxu0 0.0
    %130 = vmatprep.subr.mxu0 0.0
    %131 = vmatpush1.msra.mxu0 0.0
    %132 = vmatprep.subr.mxu0 0.0
    %133 = vmatpush1.msra.mxu0 0.0
    %134 = vmatprep.subr.mxu0 0.0
    %135 = vmatpush1.msra.mxu0 0.0
    %136 = vmatprep.subr.mxu0 0.0
    %137 = vmatpush1.msra.mxu0 0.0
    %138 = vmatprep.subr.mxu0 0.0
    %139 = vmatpush1.msra.mxu0 0.0
    %140 = vmatprep.mubr.f32.mxu0 0.0
    %141 = vmatmul.mubr.f32.gmra.mrb[0].mxu0 %v74
    %v142 = vpop.f32.mrb[0].mxu0
    %v143 = vadd.f32 %v70, %v142
    %v144 = vpop.f32.mrb[0].mxu0
    %145 = vdwg.mxu0
    %v146 = vmax.f32 %v143, 0.0
    %v147 = vld [vmem:[#allocation7] sm:$0xff]
    %v148 = vld [vmem:[#allocation7 + $0x8] sm:$0xff]
    %v149 = vld [vmem:[#allocation7 + $0x10] sm:$0xff]
    %v150 = vld [vmem:[#allocation7 + $0x18] sm:$0xff]
    %v151 = vld [vmem:[#allocation7 + $0x20] sm:$0xff]
    %v152 = vld [vmem:[#allocation7 + $0x28] sm:$0xff]
    %v153 = vld [vmem:[#allocation7 + $0x30] sm:$0xff]
    %v154 = vld [vmem:[#allocation7 + $0x38] sm:$0xff]
    %v155 = vld [vmem:[%s4] sm:$0x1]
    %v157 = vlaneseq
    %v158 = vshrl.u32 %v157, 7
    %v159 = vsub.s32 0, %v158
    %v160 = vrot.slane %v155, %v159
    %vm162 = vcmask 523264
    %v164 = vsel %vm162, %v146, 0
    %166 = vmatprep.subr.mxu0 0.0
    %167 = vmatpush1.msra.mxu0 %v147
    %168 = vmatprep.subr.mxu0 0.0
    %169 = vmatpush1.msra.mxu0 %v148
    %170 = vmatprep.subr.mxu0 0.0
    %171 = vmatpush1.msra.mxu0 %v149
    %172 = vmatprep.subr.mxu0 0.0
    %173 = vmatpush1.msra.mxu0 %v150
    %174 = vmatprep.subr.mxu0 0.0
    %175 = vmatpush1.msra.mxu0 %v151
    %176 = vmatprep.subr.mxu0 0.0
    %177 = vmatpush1.msra.mxu0 %v152
    %178 = vmatprep.subr.mxu0 0.0
    %179 = vmatpush1.msra.mxu0 %v153
    %180 = vmatprep.subr.mxu0 0.0
    %181 = vmatpush1.msra.mxu0 %v154
    %182 = vmatprep.subr.mxu0 0.0
    %183 = vmatpush1.msra.mxu0 0.0
    %184 = vmatprep.subr.mxu0 0.0
    %185 = vmatpush1.msra.mxu0 0.0
    %186 = vmatprep.subr.mxu0 0.0
    %187 = vmatpush1.msra.mxu0 0.0
    %188 = vmatprep.subr.mxu0 0.0
    %189 = vmatpush1.msra.mxu0 0.0
    %190 = vmatprep.subr.mxu0 0.0
    %191 = vmatpush1.msra.mxu0 0.0
    %192 = vmatprep.subr.mxu0 0.0
    %193 = vmatpush1.msra.mxu0 0.0
    %194 = vmatprep.subr.mxu0 0.0
    %195 = vmatpush1.msra.mxu0 0.0
    %196 = vmatprep.subr.mxu0 0.0
    %197 = vmatpush1.msra.mxu0 0.0
    %198 = vmatprep.subr.mxu0 0.0
    %199 = vmatpush1.msra.mxu0 0.0
    %200 = vmatprep.subr.mxu0 0.0
    %201 = vmatpush1.msra.mxu0 0.0
    %202 = vmatprep.subr.mxu0 0.0
    %203 = vmatpush1.msra.mxu0 0.0
    %204 = vmatprep.subr.mxu0 0.0
    %205 = vmatpush1.msra.mxu0 0.0
    %206 = vmatprep.subr.mxu0 0.0
    %207 = vmatpush1.msra.mxu0 0.0
    %208 = vmatprep.subr.mxu0 0.0
    %209 = vmatpush1.msra.mxu0 0.0
    %210 = vmatprep.subr.mxu0 0.0
    %211 = vmatpush1.msra.mxu0 0.0
    %212 = vmatprep.subr.mxu0 0.0
    %213 = vmatpush1.msra.mxu0 0.0
    %214 = vmatprep.subr.mxu0 0.0
    %215 = vmatpush1.msra.mxu0 0.0
    %216 = vmatprep.subr.mxu0 0.0
    %217 = vmatpush1.msra.mxu0 0.0
    %218 = vmatprep.subr.mxu0 0.0
    %219 = vmatpush1.msra.mxu0 0.0
    %220 = vmatprep.subr.mxu0 0.0
    %221 = vmatpush1.msra.mxu0 0.0
    %222 = vmatprep.subr.mxu0 0.0
    %223 = vmatpush1.msra.mxu0 0.0
    %224 = vmatprep.subr.mxu0 0.0
    %225 = vmatpush1.msra.mxu0 0.0
    %226 = vmatprep.subr.mxu0 0.0
    %227 = vmatpush1.msra.mxu0 0.0
    %228 = vmatprep.subr.mxu0 0.0
    %229 = vmatpush1.msra.mxu0 0.0
    %230 = vmatprep.mubr.f32.mxu0 0.0
    %231 = vmatmul.mubr.f32.gmra.mrb[0].mxu0 %v164
    %v232 = vpop.f32.mrb[0].mxu0
    %v233 = vadd.f32 %v160, %v232
    %v234 = vpop.f32.mrb[0].mxu0
    %235 = vdwg.mxu0
    %236 = vst [vmem:[#allocation8] sm:$0xff] %v233
    %v237 = vlaneseq
    %v238 = vand.u32 %v237, 127
    %vm239 = vcmp.lt.s32.totalorder %v238, 4
    %v240 = vsel %vm239, %v233, -inf
    %241 = vmax.xlane.f32.xlu0 %v240
    %v242 = vpop.xlane.xlu0 %241
    %vm243 = vcmp.eq.f32.partialorder %v240, %v242
    %v244 = vcvt.s32.f32 %v238
    %v245 = vsel %vm243, %v244, 128.0
    %246 = vmin.xlane.f32.xlu0 %v245
    %v247 = vpop.xlane.xlu0 %246
    %v248 = vcvt.f32.s32.to.zero.pseudo %v247
    %vm249 = vcmask 7168
    %250 = vst.msk [vmem:[%s6] sm:$0xff] %vm249, %v248
    // Predicated region
    $region34: #{tpu_custom_call.1} parent=1 // pred_check
      _
    $region35: #{tpu_custom_call.1} parent=1 // pred_check_branch
      %252 = sbr.rel (0) target = $region37
    $region36: #{tpu_custom_call.1} parent=1 // pred_region
      %s254 = ssub.s32 128, 128
      %255 = vsyncadd [#allocation4], %s254
      %s257 = sshll.u32 [#allocation8], 4
      %s258 = int_to_ptr.vmem [resolvable:$true] %s257
      %260 = dma.vmem_to_hbm [thread:$0]  %s258, 128, %s5, [#allocation4]
    $region37: #{tpu_custom_call.1} parent=1 // pred_fallthru
      _
    // Predicated region
    $region38: #{tpu_custom_call.1} parent=1 // pred_check
      _
    $region39: #{tpu_custom_call.1} parent=1 // pred_check_branch
      %262 = sbr.rel (0) target = $region41
    $region40: #{tpu_custom_call.1} parent=1 // pred_region
      _
    $region41: #{tpu_custom_call.1} parent=1 // pred_fallthru
      _
    // Predicated region
    $region42: #{tpu_custom_call.1} parent=1 // pred_check
      _
    $region43: #{tpu_custom_call.1} parent=1 // pred_check_branch
      %264 = sbr.rel (0) target = $region45
    $region44: #{tpu_custom_call.1} parent=1 // pred_region
      %265 = dma.done [#allocation4], 128
    $region45: #{tpu_custom_call.1} parent=1 // pred_fallthru
      _
    // Predicated region
    $region46: #{tpu_custom_call.1} parent=1 // pred_check
      _
    $region47: #{tpu_custom_call.1} parent=1 // pred_check_branch
      %267 = sbr.rel (0) target = $region49
    $region48: #{tpu_custom_call.1} parent=1 // pred_region
      _
    $region49: #{tpu_custom_call.1} parent=1 // pred_fallthru
      _
    %268 = vsyncpa [#allocation3], 1
    %269 = vsyncpa [#allocation6], 1
    %270 = vsyncpa [#allocation4], 1

</llo_original>
